<compile_context>
chip_gen: v7x
topology: tpu7x:2x2x1
jax: 0.10.0
libtpu: 0.0.40
codegen_flags: <defaults>
</compile_context>

<pallas_src>
import functools

import jax
import jax.numpy as jnp
import numpy as np
from jax.experimental import pallas as pl
from jax.experimental.pallas import tpu as pltpu


# ----------------------------- Pallas kernels -------------------------------

def _conv_kernel(p_ref, w_ref, b_ref, o_ref):
    """relu(patches @ conv_w + conv_b) for one row-tile."""
    y = jnp.dot(p_ref[...], w_ref[...], preferred_element_type=jnp.float32)
    o_ref[...] = jnp.maximum(y + b_ref[...], 0.0).astype(o_ref.dtype)


def _towers_kernel(*refs, n_layers):
    """Fused ac+moa towers: tanh((...tanh(x @ W1 + b1)...) @ Wd + bd).

    W1 is [ac_w0 | moa_w0] (concat on output dim); deeper layers are
    block-diagonal, so the running hidden is always [h_ac | h_moa] and stays
    lane-dense in VMEM.  The merged final layer is written as ONE lane-dense
    output block; the caller slices it into (ac, moa).
    """
    x_ref, o_ref = refs[0], refs[-1]
    h = x_ref[...]
    for layer in range(n_layers):
        w_ref = refs[1 + 2 * layer]
        b_ref = refs[2 + 2 * layer]
        h = jnp.dot(h, w_ref[...], preferred_element_type=jnp.float32)
        h = jnp.tanh(h + b_ref[...])
    o_ref[...] = h.astype(o_ref.dtype)


# ------------------------------ pallas wrappers ------------------------------

def _pick_row_tile(m):
    """Largest convenient row tile that divides m (single block when small)."""
    if m <= 1024:
        return m
    for t in (1024, 512, 256, 128, 64, 32, 16, 8):
        if m % t == 0:
            return t
    return m


def conv_relu(patches, w, b):
    """Fused conv-as-matmul + bias + ReLU, row-tiled over the patch rows."""
    m, k = patches.shape
    k2, n = w.shape
    assert k == k2, (k, k2)
    tm = _pick_row_tile(m)
    return pl.pallas_call(
        _conv_kernel,
        out_shape=jax.ShapeDtypeStruct((m, n), jnp.float32),
        grid=(m // tm,),
        in_specs=[
            pl.BlockSpec((tm, k), lambda i: (i, 0)),
            pl.BlockSpec((k, n), lambda i: (0, 0)),
            pl.BlockSpec((1, n), lambda i: (0, 0)),
        ],
        out_specs=pl.BlockSpec((tm, n), lambda i: (i, 0)),
        compiler_params=pltpu.CompilerParams(
            dimension_semantics=("parallel",)),
    )(patches, w, b)


def fused_towers(x, merged_layers):
    """One pallas_call for both FC towers (merged weights, VMEM resident)."""
    m = x.shape[0]
    out_dim = merged_layers[-1][0].shape[1]
    args = [x]
    for wm, bm in merged_layers:
        args += [wm, bm]
    vspec = pl.BlockSpec(memory_space=pltpu.MemorySpace.VMEM)
    kernel = functools.partial(_towers_kernel, n_layers=len(merged_layers))
    return pl.pallas_call(
        kernel,
        out_shape=jax.ShapeDtypeStruct((m, out_dim), jnp.float32),
        in_specs=[vspec for _ in args],
        out_specs=vspec,
    )(*args)


# ------------------------------- glue (JAX) ---------------------------------

def _im2col_nhwc(x, kh, kw):
    """x: (N, H, W, C) -> patches (N*Ho*Wo, kh*kw*C), column order (kh, kw, c)."""
    n, h, w, c = x.shape
    ho, wo = h - kh + 1, w - kw + 1
    cols = []
    for i in range(kh):
        for j in range(kw):
            cols.append(x[:, i:i + ho, j:j + wo, :])        # (n, ho, wo, c)
    p = jnp.stack(cols, axis=3)                             # (n, ho, wo, kh*kw, c)
    return p.reshape(n * ho * wo, kh * kw * c), (n, ho, wo)


def init_params(key, raw_in, conv_arch, ac_arch, moa_arch, hw):
    """Synthetic parameters mirroring MOAMlp.__init__ shapes (torch layouts),
    converted once into the merged / permuted layout used by the kernels.
    Also returns the raw torch-layout params for the pure-JAX reference."""
    h = w = hw
    c_in = raw_in * 3
    keys = iter(jax.random.split(key, 64))
    params, raw = {}, {}

    # --- shared conv layer; default arch is a single (out, (3, 3)) layer ---
    # TODO(synk): multi-layer conv archs would chain im2col+matmul stages.
    (c_out, (kh, kw)), = conv_arch
    w_conv = 0.1 * jax.random.normal(next(keys), (c_out, c_in, kh, kw),
                                     jnp.float32)            # PyTorch OIHW
    b_conv = 0.1 * jax.random.normal(next(keys), (c_out,), jnp.float32)
    raw["conv_w"], raw["conv_b"] = w_conv, b_conv
    # OIHW -> (kh*kw*c_in, c_out), matching the im2col column order (kh, kw, c).
    params["conv_w"] = jnp.transpose(w_conv, (2, 3, 1, 0)).reshape(
        kh * kw * c_in, c_out)
    params["conv_b"] = b_conv.reshape(1, c_out)               # pre-shaped (1, N)
    params["kh"], params["kw"], params["c_out"] = kh, kw, c_out

    ho, wo = h - kh + 1, w - kw + 1
    hw_out = ho * wo
    conv_flat = c_out * hw_out

    def make_tower(out_sizes):
        layers, d = [], conv_flat
        for o in out_sizes:
            wt = 0.1 * jax.random.normal(next(keys), (o, d), jnp.float32)  # torch (out, in)
            bt = 0.1 * jax.random.normal(next(keys), (o,), jnp.float32)
            layers.append((wt, bt))
            d = o
        return layers, d

    ac_layers, ac_out_dim = make_tower(ac_arch)
    moa_layers, moa_out_dim = make_tower(moa_arch)
    raw["ac"], raw["moa"] = ac_layers, moa_layers
    params["ac_out_dim"], params["moa_out_dim"] = ac_out_dim, moa_out_dim

    # Merged-tower path assumes equal depth (true for the module defaults).
    # TODO(synk): unequal tower depths would fall back to per-tower kernels.
    assert len(ac_layers) == len(moa_layers)

    def chw_rows_to_hwc_rows(w_in_out):
        # Fold PyTorch's (c, h, w)-flatten into the weight: rows indexed by
        # c*hw_out + p  ->  rows indexed by p*c_out + c (our conv matmul order).
        return (w_in_out.reshape(c_out, hw_out, -1)
                .transpose(1, 0, 2)
                .reshape(conv_flat, -1))

    merged = []
    for li, ((wa, ba), (wm, bm)) in enumerate(zip(ac_layers, moa_layers)):
        wa_io, wm_io = wa.T, wm.T                       # (in, out) for x @ W
        if li == 0:
            wa_io = chw_rows_to_hwc_rows(wa_io)
            wm_io = chw_rows_to_hwc_rows(wm_io)
            wmerged = jnp.concatenate([wa_io, wm_io], axis=1)
        else:
            ia, oa = wa_io.shape
            im, om = wm_io.shape
            wmerged = jnp.zeros((ia + im, oa + om), jnp.float32)
            wmerged = wmerged.at[:ia, :oa].set(wa_io).at[ia:, oa:].set(wm_io)
        bmerged = jnp.concatenate([ba, bm]).reshape(1, -1)   # pre-shaped (1, N)
        merged.append((wmerged, bmerged))
    params["fc"] = merged
    return params, raw


def moa_mlp_forward(obs_nhwc, params):
    """Mirrors MOAMlp.forward for a batched (N, H, W, C) observation."""
    kh, kw, c_out = params["kh"], params["kw"], params["c_out"]
    patches, (n, ho, wo) = _im2col_nhwc(obs_nhwc, kh, kw)
    conv = conv_relu(patches, params["conv_w"], params["conv_b"])   # (n*ho*wo, c_out)
    feats = conv.reshape(n, ho * wo * c_out)          # free row-major bitcast reshape
    latent = fused_towers(feats, params["fc"])        # (n, ac_dim + moa_dim), lane-dense
    ac_dim = params["ac_out_dim"]
    return latent[:, :ac_dim], latent[:, ac_dim:]


def reference_forward(obs_nhwc, raw):
    """Pure-JAX/XLA reference mirroring the PyTorch module exactly."""
    x = jnp.transpose(obs_nhwc, (0, 3, 1, 2))                  # NHWC -> NCHW
    y = jax.lax.conv_general_dilated(
        x, raw["conv_w"], window_strides=(1, 1), padding="VALID",
        dimension_numbers=("NCHW", "OIHW", "NCHW"))
    y = jnp.maximum(y + raw["conv_b"][None, :, None, None], 0.0)
    f = y.reshape(y.shape[0], -1)                              # NCHW flatten

    def tower(h, layers):
        for wt, bt in layers:
            h = jnp.tanh(h @ wt.T + bt)
        return h

    return tower(f, raw["ac"]), tower(f, raw["moa"])


# --------------------------------- main --------------------------------------

if __name__ == "__main__":
    key = jax.random.PRNGKey(0)
    k_obs, k_par = jax.random.split(key)

    # small shapes: batch=2, raw_in=2 -> obs channels=6, spatial 10x10
    N, HW, RAW_IN = 2, 10, 2
    conv_arch = [(8, (3, 3))]      # (out_channels, kernel_size)
    ac_arch = [128, 64]            # Linear+Tanh tower (actor-critic branch)
    moa_arch = [128, 64]           # Linear+Tanh tower (MOA branch)

    obs = jax.random.normal(k_obs, (N, HW, HW, RAW_IN * 3), jnp.float32)  # NHWC
    params, raw = init_params(k_par, RAW_IN, conv_arch, ac_arch, moa_arch, HW)

    forward = jax.jit(functools.partial(moa_mlp_forward, params=params))
    ac_out, moa_out = forward(obs)
    jax.block_until_ready((ac_out, moa_out))

    assert ac_out.shape == (N, params["ac_out_dim"])
    assert moa_out.shape == (N, params["moa_out_dim"])

    # Correctness vs. a pure-JAX reference of the PyTorch forward.
    ac_ref, moa_ref = reference_forward(obs, raw)
    np.testing.assert_allclose(np.asarray(ac_out), np.asarray(ac_ref),
                               atol=3e-2, rtol=3e-2)
    np.testing.assert_allclose(np.asarray(moa_out), np.asarray(moa_ref),
                               atol=3e-2, rtol=3e-2)

    print("KERNEL_OK")
</pallas_src>

<mosaic_0001>
module attributes {stable_mosaic.version = 11 : i64} {
  func.func @_conv_kernel(%arg0: i32, %arg1: memref<128x54xf32, #tpu.memory_space<vmem>>, %arg2: memref<54x8xf32, #tpu.memory_space<vmem>>, %arg3: memref<1x8xf32, #tpu.memory_space<vmem>>, %arg4: memref<128x8xf32, #tpu.memory_space<vmem>>) attributes {dimension_semantics = [#tpu.dimension_semantics<parallel>], iteration_bounds = array<i64: 1>, scalar_prefetch = 0 : i64, scratch_operands = 0 : i64, tpu.core_type = #tpu.core_type<tc>, window_params = [{transform_indices = @transform_0, window_bounds = array<i64: 128, 54>}, {pipeline_mode = #tpu.pipeline_mode<synchronous>, transform_indices = @transform_1, window_bounds = array<i64: 54, 8>}, {pipeline_mode = #tpu.pipeline_mode<synchronous>, transform_indices = @transform_2, window_bounds = array<i64: 1, 8>}, {transform_indices = @transform_3, window_bounds = array<i64: 128, 8>}]} {
    %c0 = arith.constant 0 : index
    %c0_0 = arith.constant 0 : index
    %0 = vector.load %arg1[%c0, %c0_0] : memref<128x54xf32, #tpu.memory_space<vmem>>, vector<128x54xf32>
    %c0_1 = arith.constant 0 : index
    %c0_2 = arith.constant 0 : index
    %1 = vector.load %arg2[%c0_1, %c0_2] : memref<54x8xf32, #tpu.memory_space<vmem>>, vector<54x8xf32>
    %cst = arith.constant dense<0.000000e+00> : vector<128x8xf32>
    %2 = tpu.matmul %0, %1, %cst {dimension_numbers = #tpu.dot_dimension_numbers<[1], [0], [0], [1], [0, 0, 1, 1], [], []>} : vector<128x54xf32>, vector<54x8xf32>, vector<128x8xf32> -> vector<128x8xf32>
    %c0_3 = arith.constant 0 : index
    %c0_4 = arith.constant 0 : index
    %3 = vector.load %arg3[%c0_3, %c0_4] : memref<1x8xf32, #tpu.memory_space<vmem>>, vector<1x8xf32>
    %4 = vector.broadcast %3 : vector<1x8xf32> to vector<128x8xf32>
    %5 = arith.addf %2, %4 : vector<128x8xf32>
    %cst_5 = arith.constant 0.000000e+00 : f32
    %6 = vector.broadcast %cst_5 : f32 to vector<128x8xf32>
    %7 = arith.maximumf %5, %6 : vector<128x8xf32>
    %c0_6 = arith.constant 0 : index
    %c0_7 = arith.constant 0 : index
    %8 = vector.load %arg4[%c0_6, %c0_7] : memref<128x8xf32, #tpu.memory_space<vmem>>, vector<128x8xf32>
    tpu.vector_store %arg4[%c0_6, %c0_7], %7 {strides = array<i32>} : memref<128x8xf32, #tpu.memory_space<vmem>>, vector<128x8xf32>,
    return
  }
  func.func @transform_0(%arg0: i32) -> (i32, i32) {
    %c0_i32 = arith.constant 0 : i32
    %c0_i32_0 = arith.constant 0 : i32
    return %arg0, %c0_i32 : i32, i32
  }
  func.func @transform_1(%arg0: i32) -> (i32, i32) {
    %c0_i32 = arith.constant 0 : i32
    %c0_i32_0 = arith.constant 0 : i32
    %c0_i32_1 = arith.constant 0 : i32
    return %c0_i32, %c0_i32_0 : i32, i32
  }
  func.func @transform_2(%arg0: i32) -> (i32, i32) {
    %c0_i32 = arith.constant 0 : i32
    %c0_i32_0 = arith.constant 0 : i32
    %c0_i32_1 = arith.constant 0 : i32
    return %c0_i32, %c0_i32_0 : i32, i32
  }
  func.func @transform_3(%arg0: i32) -> (i32, i32) {
    %c0_i32 = arith.constant 0 : i32
    %c0_i32_0 = arith.constant 0 : i32
    return %arg0, %c0_i32 : i32, i32
  }
}

module attributes {stable_mosaic.version = 11 : i64} {
  func.func @_towers_kernel(%arg0: memref<2x512xf32, #tpu.memory_space<vmem>>, %arg1: memref<512x256xf32, #tpu.memory_space<vmem>>, %arg2: memref<1x256xf32, #tpu.memory_space<vmem>>, %arg3: memref<256x128xf32, #tpu.memory_space<vmem>>, %arg4: memref<1x128xf32, #tpu.memory_space<vmem>>, %arg5: memref<2x128xf32, #tpu.memory_space<vmem>>) attributes {dimension_semantics = [], scalar_prefetch = 0 : i64, scratch_operands = 0 : i64, tpu.core_type = #tpu.core_type<tc>} {
    %c0 = arith.constant 0 : index
    %c0_0 = arith.constant 0 : index
    %0 = vector.load %arg0[%c0, %c0_0] : memref<2x512xf32, #tpu.memory_space<vmem>>, vector<2x512xf32>
    %c0_1 = arith.constant 0 : index
    %c0_2 = arith.constant 0 : index
    %1 = vector.load %arg1[%c0_1, %c0_2] : memref<512x256xf32, #tpu.memory_space<vmem>>, vector<512x256xf32>
    %cst = arith.constant dense<0.000000e+00> : vector<2x256xf32>
    %2 = tpu.matmul %0, %1, %cst {dimension_numbers = #tpu.dot_dimension_numbers<[1], [0], [0], [1], [0, 0, 1, 1], [], []>} : vector<2x512xf32>, vector<512x256xf32>, vector<2x256xf32> -> vector<2x256xf32>
    %c0_3 = arith.constant 0 : index
    %c0_4 = arith.constant 0 : index
    %3 = vector.load %arg2[%c0_3, %c0_4] : memref<1x256xf32, #tpu.memory_space<vmem>>, vector<1x256xf32>
    %4 = vector.broadcast %3 : vector<1x256xf32> to vector<2x256xf32>
    %5 = arith.addf %2, %4 : vector<2x256xf32>
    %6 = math.tanh %5 : vector<2x256xf32>
    %c0_5 = arith.constant 0 : index
    %c0_6 = arith.constant 0 : index
    %7 = vector.load %arg3[%c0_5, %c0_6] : memref<256x128xf32, #tpu.memory_space<vmem>>, vector<256x128xf32>
    %cst_7 = arith.constant dense<0.000000e+00> : vector<2x128xf32>
    %8 = tpu.matmul %6, %7, %cst_7 {dimension_numbers = #tpu.dot_dimension_numbers<[1], [0], [0], [1], [0, 0, 1, 1], [], []>} : vector<2x256xf32>, vector<256x128xf32>, vector<2x128xf32> -> vector<2x128xf32>
    %c0_8 = arith.constant 0 : index
    %c0_9 = arith.constant 0 : index
    %9 = vector.load %arg4[%c0_8, %c0_9] : memref<1x128xf32, #tpu.memory_space<vmem>>, vector<1x128xf32>
    %10 = vector.broadcast %9 : vector<1x128xf32> to vector<2x128xf32>
    %11 = arith.addf %8, %10 : vector<2x128xf32>
    %12 = math.tanh %11 : vector<2x128xf32>
    %c0_10 = arith.constant 0 : index
    %c0_11 = arith.constant 0 : index
    %13 = vector.load %arg5[%c0_10, %c0_11] : memref<2x128xf32, #tpu.memory_space<vmem>>, vector<2x128xf32>
    tpu.vector_store %arg5[%c0_10, %c0_11], %12 {strides = array<i32>} : memref<2x128xf32, #tpu.memory_space<vmem>>, vector<2x128xf32>,
    return
  }
}

</mosaic_0001>

<llo_original>
// kernel: moa_mlp_forward.2
$region0: #{moa_mlp_forward.2}
  #allocation0 [shape = 'u32[]', space=smem, size = 0x4, offset = 0x4, fixed_abs, tag = 'smem constant byte address 0x4 - core index']
  #allocation1 [shape = 'u32[144,128]{1,0:T(1,128)}', space=vmem, size = 0x12000, scoped, tag = 'internal scratch']
  %s0 = inlined_call_operand.vmem [shape: f32[128,54], index: 0, kind: input, shape index: {}]
  %s1 = inlined_call_operand.vmem [shape: f32[54,8], index: 1, kind: input, shape index: {}]
  %s2 = inlined_call_operand.vmem [shape: f32[1,8], index: 2, kind: input, shape index: {}]
  %s3 = inlined_call_operand.vmem [shape: f32[128,8], index: 3, kind: output, shape index: {}]
  %s4 = sld [smem:[#allocation0]]
  $region22: #{moa_mlp_forward.2} parent=0
    _
  %s6 = ssub.s32 1, %s4
  %s7 = scalar_select 0, %s6, %s4
  // Predicated region
  $region2: #{moa_mlp_forward.2} parent=0 // pred_check
    _
  $region3: #{moa_mlp_forward.2} parent=0 // pred_check_branch
    %9 = sbr.rel (0) target = $region5
  $region4: #{moa_mlp_forward.2} parent=0 // pred_region
    _
  $region5: #{moa_mlp_forward.2} parent=0 // pred_fallthru
    _
  // Predicated region
  $region6: #{moa_mlp_forward.2} parent=0 // pred_check
    _
  $region7: #{moa_mlp_forward.2} parent=0 // pred_check_branch
    %11 = sbr.rel (0) target = $region9
  $region8: #{moa_mlp_forward.2} parent=0 // pred_region
    _
  $region9: #{moa_mlp_forward.2} parent=0 // pred_fallthru
    _
  // Predicated region
  $region10: #{moa_mlp_forward.2} parent=0 // pred_check
    _
  $region11: #{moa_mlp_forward.2} parent=0 // pred_check_branch
    %13 = sbr.rel (0) target = $region13
  $region12: #{moa_mlp_forward.2} parent=0 // pred_region
    _
  $region13: #{moa_mlp_forward.2} parent=0 // pred_fallthru
    _
  %v14 = vld [vmem:[%s0] sm:$0xff]
  %v15 = vld [vmem:[%s0 + $0x8] sm:$0xff]
  %v16 = vld [vmem:[%s0 + $0x10] sm:$0xff]
  %v17 = vld [vmem:[%s0 + $0x18] sm:$0xff]
  %v18 = vld [vmem:[%s0 + $0x20] sm:$0xff]
  %v19 = vld [vmem:[%s0 + $0x28] sm:$0xff]
  %v20 = vld [vmem:[%s0 + $0x30] sm:$0xff]
  %v21 = vld [vmem:[%s0 + $0x38] sm:$0xff]
  %v22 = vld [vmem:[%s0 + $0x40] sm:$0xff]
  %v23 = vld [vmem:[%s0 + $0x48] sm:$0xff]
  %v24 = vld [vmem:[%s0 + $0x50] sm:$0xff]
  %v25 = vld [vmem:[%s0 + $0x58] sm:$0xff]
  %v26 = vld [vmem:[%s0 + $0x60] sm:$0xff]
  %v27 = vld [vmem:[%s0 + $0x68] sm:$0xff]
  %v28 = vld [vmem:[%s0 + $0x70] sm:$0xff]
  %v29 = vld [vmem:[%s0 + $0x78] sm:$0xff]
  %v30 = vld [vmem:[%s1] sm:$0xff]
  %v31 = vld [vmem:[%s1 + $0x8] sm:$0xff]
  %v32 = vld [vmem:[%s1 + $0x10] sm:$0xff]
  %v33 = vld [vmem:[%s1 + $0x18] sm:$0xff]
  %v34 = vld [vmem:[%s1 + $0x20] sm:$0xff]
  %v35 = vld [vmem:[%s1 + $0x28] sm:$0xff]
  %v36 = vld [vmem:[%s1 + $0x30] sm:$0x3f]
  %v37 = vld [vmem:[%s2] sm:$0x1]
  %v39 = vlaneseq
  %v40 = vshrl.u32 %v39, 7
  %v41 = vsub.s32 0, %v40
  %v42 = vrot.slane %v37, %v41
  %vm44 = vcmask 441344
  %v46 = vsel %vm44, %v14, 0
  %v49 = vsel %vm44, %v15, 0
  %v52 = vsel %vm44, %v16, 0
  %v55 = vsel %vm44, %v17, 0
  %v58 = vsel %vm44, %v18, 0
  %v61 = vsel %vm44, %v19, 0
  %v64 = vsel %vm44, %v20, 0
  %v67 = vsel %vm44, %v21, 0
  %v70 = vsel %vm44, %v22, 0
  %v73 = vsel %vm44, %v23, 0
  %v76 = vsel %vm44, %v24, 0
  %v79 = vsel %vm44, %v25, 0
  %v82 = vsel %vm44, %v26, 0
  %v85 = vsel %vm44, %v27, 0
  %v88 = vsel %vm44, %v28, 0
  %v91 = vsel %vm44, %v29, 0
  %vm93 = vcmask 1045504
  %v95 = vsel %vm93, %v36, 0
  %97 = vmatprep.subr.mxu0 0.0
  %98 = vmatpush1.msra.mxu0 %v30
  %99 = vmatprep.subr.mxu0 0.0
  %100 = vmatpush1.msra.mxu0 %v31
  %101 = vmatprep.subr.mxu0 0.0
  %102 = vmatpush1.msra.mxu0 %v32
  %103 = vmatprep.subr.mxu0 0.0
  %104 = vmatpush1.msra.mxu0 %v33
  %105 = vmatprep.subr.mxu0 0.0
  %106 = vmatpush1.msra.mxu0 %v34
  %107 = vmatprep.subr.mxu0 0.0
  %108 = vmatpush1.msra.mxu0 %v35
  %109 = vmatprep.subr.mxu0 0.0
  %110 = vmatpush1.msra.mxu0 %v95
  %111 = vmatprep.subr.mxu0 0.0
  %112 = vmatpush1.msra.mxu0 0.0
  %113 = vmatprep.subr.mxu0 0.0
  %114 = vmatpush1.msra.mxu0 0.0
  %115 = vmatprep.subr.mxu0 0.0
  %116 = vmatpush1.msra.mxu0 0.0
  %117 = vmatprep.subr.mxu0 0.0
  %118 = vmatpush1.msra.mxu0 0.0
  %119 = vmatprep.subr.mxu0 0.0
  %120 = vmatpush1.msra.mxu0 0.0
  %121 = vmatprep.subr.mxu0 0.0
  %122 = vmatpush1.msra.mxu0 0.0
  %123 = vmatprep.subr.mxu0 0.0
  %124 = vmatpush1.msra.mxu0 0.0
  %125 = vmatprep.subr.mxu0 0.0
  %126 = vmatpush1.msra.mxu0 0.0
  %127 = vmatprep.subr.mxu0 0.0
  %128 = vmatpush1.msra.mxu0 0.0
  %129 = vmatprep.subr.mxu0 0.0
  %130 = vmatpush1.msra.mxu0 0.0
  %131 = vmatprep.subr.mxu0 0.0
  %132 = vmatpush1.msra.mxu0 0.0
  %133 = vmatprep.subr.mxu0 0.0
  %134 = vmatpush1.msra.mxu0 0.0
  %135 = vmatprep.subr.mxu0 0.0
  %136 = vmatpush1.msra.mxu0 0.0
  %137 = vmatprep.subr.mxu0 0.0
  %138 = vmatpush1.msra.mxu0 0.0
  %139 = vmatprep.subr.mxu0 0.0
  %140 = vmatpush1.msra.mxu0 0.0
  %141 = vmatprep.subr.mxu0 0.0
  %142 = vmatpush1.msra.mxu0 0.0
  %143 = vmatprep.subr.mxu0 0.0
  %144 = vmatpush1.msra.mxu0 0.0
  %145 = vmatprep.subr.mxu0 0.0
  %146 = vmatpush1.msra.mxu0 0.0
  %147 = vmatprep.subr.mxu0 0.0
  %148 = vmatpush1.msra.mxu0 0.0
  %149 = vmatprep.subr.mxu0 0.0
  %150 = vmatpush1.msra.mxu0 0.0
  %151 = vmatprep.subr.mxu0 0.0
  %152 = vmatpush1.msra.mxu0 0.0
  %153 = vmatprep.subr.mxu0 0.0
  %154 = vmatpush1.msra.mxu0 0.0
  %155 = vmatprep.subr.mxu0 0.0
  %156 = vmatpush1.msra.mxu0 0.0
  %157 = vmatprep.subr.mxu0 0.0
  %158 = vmatpush1.msra.mxu0 0.0
  %159 = vmatprep.subr.mxu0 0.0
  %160 = vmatpush1.msra.mxu0 0.0
  %161 = vmatprep.mubr.f32.mxu0 0.0
  %162 = vmatmul.mubr.f32.gmra.mrb[0].mxu0 %v46
  %v163 = vpop.f32.mrb[0].mxu0
  %v164 = vadd.f32 %v42, %v163
  %v165 = vpop.f32.mrb[0].mxu0
  %166 = vmatprep.mubr.f32.mxu0 0.0
  %167 = vmatmul.mubr.f32.gmra.mrb[0].mxu0 %v49
  %v168 = vpop.f32.mrb[0].mxu0
  %v169 = vadd.f32 %v42, %v168
  %v170 = vpop.f32.mrb[0].mxu0
  %171 = vmatprep.mubr.f32.mxu0 0.0
  %172 = vmatmul.mubr.f32.gmra.mrb[0].mxu0 %v52
  %v173 = vpop.f32.mrb[0].mxu0
  %v174 = vadd.f32 %v42, %v173
  %v175 = vpop.f32.mrb[0].mxu0
  %176 = vmatprep.mubr.f32.mxu0 0.0
  %177 = vmatmul.mubr.f32.gmra.mrb[0].mxu0 %v55
  %v178 = vpop.f32.mrb[0].mxu0
  %v179 = vadd.f32 %v42, %v178
  %v180 = vpop.f32.mrb[0].mxu0
  %181 = vmatprep.mubr.f32.mxu0 0.0
  %182 = vmatmul.mubr.f32.gmra.mrb[0].mxu0 %v58
  %v183 = vpop.f32.mrb[0].mxu0
  %v184 = vadd.f32 %v42, %v183
  %v185 = vpop.f32.mrb[0].mxu0
  %186 = vmatprep.mubr.f32.mxu0 0.0
  %187 = vmatmul.mubr.f32.gmra.mrb[0].mxu0 %v61
  %v188 = vpop.f32.mrb[0].mxu0
  %v189 = vadd.f32 %v42, %v188
  %v190 = vpop.f32.mrb[0].mxu0
  %191 = vmatprep.mubr.f32.mxu0 0.0
  %192 = vmatmul.mubr.f32.gmra.mrb[0].mxu0 %v64
  %v193 = vpop.f32.mrb[0].mxu0
  %v194 = vadd.f32 %v42, %v193
  %v195 = vpop.f32.mrb[0].mxu0
  %196 = vmatprep.mubr.f32.mxu0 0.0
  %197 = vmatmul.mubr.f32.gmra.mrb[0].mxu0 %v67
  %v198 = vpop.f32.mrb[0].mxu0
  %v199 = vadd.f32 %v42, %v198
  %v200 = vpop.f32.mrb[0].mxu0
  %201 = vmatprep.mubr.f32.mxu0 0.0
  %202 = vmatmul.mubr.f32.gmra.mrb[0].mxu0 %v70
  %v203 = vpop.f32.mrb[0].mxu0
  %v204 = vadd.f32 %v42, %v203
  %v205 = vpop.f32.mrb[0].mxu0
  %206 = vmatprep.mubr.f32.mxu0 0.0
  %207 = vmatmul.mubr.f32.gmra.mrb[0].mxu0 %v73
  %v208 = vpop.f32.mrb[0].mxu0
  %v209 = vadd.f32 %v42, %v208
  %v210 = vpop.f32.mrb[0].mxu0
  %211 = vmatprep.mubr.f32.mxu0 0.0
  %212 = vmatmul.mubr.f32.gmra.mrb[0].mxu0 %v76
  %v213 = vpop.f32.mrb[0].mxu0
  %v214 = vadd.f32 %v42, %v213
  %v215 = vpop.f32.mrb[0].mxu0
  %216 = vmatprep.mubr.f32.mxu0 0.0
  %217 = vmatmul.mubr.f32.gmra.mrb[0].mxu0 %v79
  %v218 = vpop.f32.mrb[0].mxu0
  %v219 = vadd.f32 %v42, %v218
  %v220 = vpop.f32.mrb[0].mxu0
  %221 = vmatprep.mubr.f32.mxu0 0.0
  %222 = vmatmul.mubr.f32.gmra.mrb[0].mxu0 %v82
  %v223 = vpop.f32.mrb[0].mxu0
  %v224 = vadd.f32 %v42, %v223
  %v225 = vpop.f32.mrb[0].mxu0
  %226 = vmatprep.mubr.f32.mxu0 0.0
  %227 = vmatmul.mubr.f32.gmra.mrb[0].mxu0 %v85
  %v228 = vpop.f32.mrb[0].mxu0
  %v229 = vadd.f32 %v42, %v228
  %v230 = vpop.f32.mrb[0].mxu0
  %231 = vmatprep.mubr.f32.mxu0 0.0
  %232 = vmatmul.mubr.f32.gmra.mrb[0].mxu0 %v88
  %v233 = vpop.f32.mrb[0].mxu0
  %v234 = vadd.f32 %v42, %v233
  %v235 = vpop.f32.mrb[0].mxu0
  %236 = vmatprep.mubr.f32.mxu0 0.0
  %237 = vmatmul.mubr.f32.gmra.mrb[0].mxu0 %v91
  %v238 = vpop.f32.mrb[0].mxu0
  %v239 = vadd.f32 %v42, %v238
  %v240 = vpop.f32.mrb[0].mxu0
  %241 = vdwg.mxu0
  %v242 = vmax.f32 %v164, 0.0
  %v243 = vmax.f32 %v169, 0.0
  %v244 = vmax.f32 %v174, 0.0
  %v245 = vmax.f32 %v179, 0.0
  %v246 = vmax.f32 %v184, 0.0
  %v247 = vmax.f32 %v189, 0.0
  %v248 = vmax.f32 %v194, 0.0
  %v249 = vmax.f32 %v199, 0.0
  %v250 = vmax.f32 %v204, 0.0
  %v251 = vmax.f32 %v209, 0.0
  %v252 = vmax.f32 %v214, 0.0
  %v253 = vmax.f32 %v219, 0.0
  %v254 = vmax.f32 %v224, 0.0
  %v255 = vmax.f32 %v229, 0.0
  %v256 = vmax.f32 %v234, 0.0
  %v257 = vmax.f32 %v239, 0.0
  %vm258 = vcmask 64512
  %259 = vst.msk [vmem:[%s3] sm:$0xff] %vm258, %v242
  %260 = vst.msk [vmem:[%s3 + $0x8] sm:$0xff] %vm258, %v243
  %261 = vst.msk [vmem:[%s3 + $0x10] sm:$0xff] %vm258, %v244
  %262 = vst.msk [vmem:[%s3 + $0x18] sm:$0xff] %vm258, %v245
  %263 = vst.msk [vmem:[%s3 + $0x20] sm:$0xff] %vm258, %v246
  %264 = vst.msk [vmem:[%s3 + $0x28] sm:$0xff] %vm258, %v247
  %265 = vst.msk [vmem:[%s3 + $0x30] sm:$0xff] %vm258, %v248
  %266 = vst.msk [vmem:[%s3 + $0x38] sm:$0xff] %vm258, %v249
  %267 = vst.msk [vmem:[%s3 + $0x40] sm:$0xff] %vm258, %v250
  %268 = vst.msk [vmem:[%s3 + $0x48] sm:$0xff] %vm258, %v251
  %269 = vst.msk [vmem:[%s3 + $0x50] sm:$0xff] %vm258, %v252
  %270 = vst.msk [vmem:[%s3 + $0x58] sm:$0xff] %vm258, %v253
  %271 = vst.msk [vmem:[%s3 + $0x60] sm:$0xff] %vm258, %v254
  %272 = vst.msk [vmem:[%s3 + $0x68] sm:$0xff] %vm258, %v255
  %273 = vst.msk [vmem:[%s3 + $0x70] sm:$0xff] %vm258, %v256
  %274 = vst.msk [vmem:[%s3 + $0x78] sm:$0xff] %vm258, %v257
  // Predicated region
  $region14: #{moa_mlp_forward.2} parent=0 // pred_check
    _
  $region15: #{moa_mlp_forward.2} parent=0 // pred_check_branch
    %276 = sbr.rel (0) target = $region17
  $region16: #{moa_mlp_forward.2} parent=0 // pred_region
    _
  $region17: #{moa_mlp_forward.2} parent=0 // pred_fallthru
    _
  // Predicated region
  $region18: #{moa_mlp_forward.2} parent=0 // pred_check
    _
  $region19: #{moa_mlp_forward.2} parent=0 // pred_check_branch
    %278 = sbr.rel (0) target = $region21
  $region20: #{moa_mlp_forward.2} parent=0 // pred_region
    _
  $region21: #{moa_mlp_forward.2} parent=0 // pred_fallthru
    _

// kernel: moa_mlp_forward.3
$region0: #{moa_mlp_forward.3}
  #allocation0 [shape = 'u32[]', space=smem, size = 0x4, offset = 0x4, fixed_abs, tag = 'smem constant byte address 0x4 - core index']
  #allocation1 [shape = 'u32[144,128]{1,0:T(1,128)}', space=vmem, size = 0x12000, scoped, tag = 'internal scratch']
  %s0 = inlined_call_operand.vmem [shape: f32[2,512], index: 0, kind: input, shape index: {}]
  %s1 = inlined_call_operand.vmem [shape: f32[512,256], index: 1, kind: input, shape index: {}]
  %s2 = inlined_call_operand.vmem [shape: f32[1,256], index: 2, kind: input, shape index: {}]
  %s3 = inlined_call_operand.vmem [shape: f32[256,128], index: 3, kind: input, shape index: {}]
  %s4 = inlined_call_operand.vmem [shape: f32[1,128], index: 4, kind: input, shape index: {}]
  %s5 = inlined_call_operand.vmem [shape: f32[2,128], index: 5, kind: output, shape index: {}]
  %s6 = sld [smem:[#allocation0]]
  $region30: #{moa_mlp_forward.3} parent=0
    _
  %s8 = ssub.s32 1, %s6
  %s9 = scalar_select 0, %s8, %s6
  // Predicated region
  $region2: #{moa_mlp_forward.3} parent=0 // pred_check
    _
  $region3: #{moa_mlp_forward.3} parent=0 // pred_check_branch
    %11 = sbr.rel (0) target = $region5
  $region4: #{moa_mlp_forward.3} parent=0 // pred_region
    _
  $region5: #{moa_mlp_forward.3} parent=0 // pred_fallthru
    _
  // Predicated region
  $region6: #{moa_mlp_forward.3} parent=0 // pred_check
    _
  $region7: #{moa_mlp_forward.3} parent=0 // pred_check_branch
    %13 = sbr.rel (0) target = $region9
  $region8: #{moa_mlp_forward.3} parent=0 // pred_region
    _
  $region9: #{moa_mlp_forward.3} parent=0 // pred_fallthru
    _
  // Predicated region
  $region10: #{moa_mlp_forward.3} parent=0 // pred_check
    _
  $region11: #{moa_mlp_forward.3} parent=0 // pred_check_branch
    %15 = sbr.rel (0) target = $region13
  $region12: #{moa_mlp_forward.3} parent=0 // pred_region
    _
  $region13: #{moa_mlp_forward.3} parent=0 // pred_fallthru
    _
  // Predicated region
  $region14: #{moa_mlp_forward.3} parent=0 // pred_check
    _
  $region15: #{moa_mlp_forward.3} parent=0 // pred_check_branch
    %17 = sbr.rel (0) target = $region17
  $region16: #{moa_mlp_forward.3} parent=0 // pred_region
    _
  $region17: #{moa_mlp_forward.3} parent=0 // pred_fallthru
    _
  // Predicated region
  $region18: #{moa_mlp_forward.3} parent=0 // pred_check
    _
  $region19: #{moa_mlp_forward.3} parent=0 // pred_check_branch
    %19 = sbr.rel (0) target = $region21
  $region20: #{moa_mlp_forward.3} parent=0 // pred_region
    _
  $region21: #{moa_mlp_forward.3} parent=0 // pred_fallthru
    _
  %v20 = vld [vmem:[%s0] sm:$0xff]
  %v21 = vld [vmem:[%s1] sm:$0xff]
  %v22 = vld [vmem:[%s1 + $0x8] sm:$0xff]
  %v23 = vld [vmem:[%s1 + $0x10] sm:$0xff]
  %v24 = vld [vmem:[%s1 + $0x18] sm:$0xff]
  %v25 = vld [vmem:[%s1 + $0x20] sm:$0xff]
  %v26 = vld [vmem:[%s1 + $0x28] sm:$0xff]
  %v27 = vld [vmem:[%s1 + $0x30] sm:$0xff]
  %v28 = vld [vmem:[%s1 + $0x38] sm:$0xff]
  %v29 = vld [vmem:[%s1 + $0x40] sm:$0xff]
  %v30 = vld [vmem:[%s1 + $0x48] sm:$0xff]
  %v31 = vld [vmem:[%s1 + $0x50] sm:$0xff]
  %v32 = vld [vmem:[%s1 + $0x58] sm:$0xff]
  %v33 = vld [vmem:[%s1 + $0x60] sm:$0xff]
  %v34 = vld [vmem:[%s1 + $0x68] sm:$0xff]
  %v35 = vld [vmem:[%s1 + $0x70] sm:$0xff]
  %v36 = vld [vmem:[%s1 + $0x78] sm:$0xff]
  %v37 = vld [vmem:[%s1 + $0x80] sm:$0xff]
  %v38 = vld [vmem:[%s1 + $0x88] sm:$0xff]
  %v39 = vld [vmem:[%s1 + $0x90] sm:$0xff]
  %v40 = vld [vmem:[%s1 + $0x98] sm:$0xff]
  %v41 = vld [vmem:[%s1 + $0xa0] sm:$0xff]
  %v42 = vld [vmem:[%s1 + $0xa8] sm:$0xff]
  %v43 = vld [vmem:[%s1 + $0xb0] sm:$0xff]
  %v44 = vld [vmem:[%s1 + $0xb8] sm:$0xff]
  %v45 = vld [vmem:[%s1 + $0xc0] sm:$0xff]
  %v46 = vld [vmem:[%s1 + $0xc8] sm:$0xff]
  %v47 = vld [vmem:[%s1 + $0xd0] sm:$0xff]
  %v48 = vld [vmem:[%s1 + $0xd8] sm:$0xff]
  %v49 = vld [vmem:[%s1 + $0xe0] sm:$0xff]
  %v50 = vld [vmem:[%s1 + $0xe8] sm:$0xff]
  %v51 = vld [vmem:[%s1 + $0xf0] sm:$0xff]
  %v52 = vld [vmem:[%s1 + $0xf8] sm:$0xff]
  %v53 = vld [vmem:[%s1 + $0x100] sm:$0xff]
  %v54 = vld [vmem:[%s1 + $0x108] sm:$0xff]
  %v55 = vld [vmem:[%s1 + $0x110] sm:$0xff]
  %v56 = vld [vmem:[%s1 + $0x118] sm:$0xff]
  %v57 = vld [vmem:[%s1 + $0x120] sm:$0xff]
  %v58 = vld [vmem:[%s1 + $0x128] sm:$0xff]
  %v59 = vld [vmem:[%s1 + $0x130] sm:$0xff]
  %v60 = vld [vmem:[%s1 + $0x138] sm:$0xff]
  %v61 = vld [vmem:[%s1 + $0x140] sm:$0xff]
  %v62 = vld [vmem:[%s1 + $0x148] sm:$0xff]
  %v63 = vld [vmem:[%s1 + $0x150] sm:$0xff]
  %v64 = vld [vmem:[%s1 + $0x158] sm:$0xff]
  %v65 = vld [vmem:[%s1 + $0x160] sm:$0xff]
  %v66 = vld [vmem:[%s1 + $0x168] sm:$0xff]
  %v67 = vld [vmem:[%s1 + $0x170] sm:$0xff]
  %v68 = vld [vmem:[%s1 + $0x178] sm:$0xff]
  %v69 = vld [vmem:[%s1 + $0x180] sm:$0xff]
  %v70 = vld [vmem:[%s1 + $0x188] sm:$0xff]
  %v71 = vld [vmem:[%s1 + $0x190] sm:$0xff]
  %v72 = vld [vmem:[%s1 + $0x198] sm:$0xff]
  %v73 = vld [vmem:[%s1 + $0x1a0] sm:$0xff]
  %v74 = vld [vmem:[%s1 + $0x1a8] sm:$0xff]
  %v75 = vld [vmem:[%s1 + $0x1b0] sm:$0xff]
  %v76 = vld [vmem:[%s1 + $0x1b8] sm:$0xff]
  %v77 = vld [vmem:[%s1 + $0x1c0] sm:$0xff]
  %v78 = vld [vmem:[%s1 + $0x1c8] sm:$0xff]
  %v79 = vld [vmem:[%s1 + $0x1d0] sm:$0xff]
  %v80 = vld [vmem:[%s1 + $0x1d8] sm:$0xff]
  %v81 = vld [vmem:[%s1 + $0x1e0] sm:$0xff]
  %v82 = vld [vmem:[%s1 + $0x1e8] sm:$0xff]
  %v83 = vld [vmem:[%s1 + $0x1f0] sm:$0xff]
  %v84 = vld [vmem:[%s1 + $0x1f8] sm:$0xff]
  %v85 = vld [vmem:[%s1 + $0x200] sm:$0xff]
  %v86 = vld [vmem:[%s1 + $0x208] sm:$0xff]
  %v87 = vld [vmem:[%s1 + $0x210] sm:$0xff]
  %v88 = vld [vmem:[%s1 + $0x218] sm:$0xff]
  %v89 = vld [vmem:[%s1 + $0x220] sm:$0xff]
  %v90 = vld [vmem:[%s1 + $0x228] sm:$0xff]
  %v91 = vld [vmem:[%s1 + $0x230] sm:$0xff]
  %v92 = vld [vmem:[%s1 + $0x238] sm:$0xff]
  %v93 = vld [vmem:[%s1 + $0x240] sm:$0xff]
  %v94 = vld [vmem:[%s1 + $0x248] sm:$0xff]
  %v95 = vld [vmem:[%s1 + $0x250] sm:$0xff]
  %v96 = vld [vmem:[%s1 + $0x258] sm:$0xff]
  %v97 = vld [vmem:[%s1 + $0x260] sm:$0xff]
  %v98 = vld [vmem:[%s1 + $0x268] sm:$0xff]
  %v99 = vld [vmem:[%s1 + $0x270] sm:$0xff]
  %v100 = vld [vmem:[%s1 + $0x278] sm:$0xff]
  %v101 = vld [vmem:[%s1 + $0x280] sm:$0xff]
  %v102 = vld [vmem:[%s1 + $0x288] sm:$0xff]
  %v103 = vld [vmem:[%s1 + $0x290] sm:$0xff]
  %v104 = vld [vmem:[%s1 + $0x298] sm:$0xff]
  %v105 = vld [vmem:[%s1 + $0x2a0] sm:$0xff]
  %v106 = vld [vmem:[%s1 + $0x2a8] sm:$0xff]
  %v107 = vld [vmem:[%s1 + $0x2b0] sm:$0xff]
  %v108 = vld [vmem:[%s1 + $0x2b8] sm:$0xff]
  %v109 = vld [vmem:[%s1 + $0x2c0] sm:$0xff]
  %v110 = vld [vmem:[%s1 + $0x2c8] sm:$0xff]
  %v111 = vld [vmem:[%s1 + $0x2d0] sm:$0xff]
  %v112 = vld [vmem:[%s1 + $0x2d8] sm:$0xff]
  %v113 = vld [vmem:[%s1 + $0x2e0] sm:$0xff]
  %v114 = vld [vmem:[%s1 + $0x2e8] sm:$0xff]
  %v115 = vld [vmem:[%s1 + $0x2f0] sm:$0xff]
  %v116 = vld [vmem:[%s1 + $0x2f8] sm:$0xff]
  %v117 = vld [vmem:[%s1 + $0x300] sm:$0xff]
  %v118 = vld [vmem:[%s1 + $0x308] sm:$0xff]
  %v119 = vld [vmem:[%s1 + $0x310] sm:$0xff]
  %v120 = vld [vmem:[%s1 + $0x318] sm:$0xff]
  %v121 = vld [vmem:[%s1 + $0x320] sm:$0xff]
  %v122 = vld [vmem:[%s1 + $0x328] sm:$0xff]
  %v123 = vld [vmem:[%s1 + $0x330] sm:$0xff]
  %v124 = vld [vmem:[%s1 + $0x338] sm:$0xff]
  %v125 = vld [vmem:[%s1 + $0x340] sm:$0xff]
  %v126 = vld [vmem:[%s1 + $0x348] sm:$0xff]
  %v127 = vld [vmem:[%s1 + $0x350] sm:$0xff]
  %v128 = vld [vmem:[%s1 + $0x358] sm:$0xff]
  %v129 = vld [vmem:[%s1 + $0x360] sm:$0xff]
  %v130 = vld [vmem:[%s1 + $0x368] sm:$0xff]
  %v131 = vld [vmem:[%s1 + $0x370] sm:$0xff]
  %v132 = vld [vmem:[%s1 + $0x378] sm:$0xff]
  %v133 = vld [vmem:[%s1 + $0x380] sm:$0xff]
  %v134 = vld [vmem:[%s1 + $0x388] sm:$0xff]
  %v135 = vld [vmem:[%s1 + $0x390] sm:$0xff]
  %v136 = vld [vmem:[%s1 + $0x398] sm:$0xff]
  %v137 = vld [vmem:[%s1 + $0x3a0] sm:$0xff]
  %v138 = vld [vmem:[%s1 + $0x3a8] sm:$0xff]
  %v139 = vld [vmem:[%s1 + $0x3b0] sm:$0xff]
  %v140 = vld [vmem:[%s1 + $0x3b8] sm:$0xff]
  %v141 = vld [vmem:[%s1 + $0x3c0] sm:$0xff]
  %v142 = vld [vmem:[%s1 + $0x3c8] sm:$0xff]
  %v143 = vld [vmem:[%s1 + $0x3d0] sm:$0xff]
  %v144 = vld [vmem:[%s1 + $0x3d8] sm:$0xff]
  %v145 = vld [vmem:[%s1 + $0x3e0] sm:$0xff]
  %v146 = vld [vmem:[%s1 + $0x3e8] sm:$0xff]
  %v147 = vld [vmem:[%s1 + $0x3f0] sm:$0xff]
  %v148 = vld [vmem:[%s1 + $0x3f8] sm:$0xff]
  %v149 = vld [vmem:[%s2] sm:$0x3]
  %v151 = vlaneseq
  %v152 = vshrl.u32 %v151, 7
  %v153 = vsub.s32 0, %v152
  %v154 = vrot.slane %v149, %v153
  %v155 = vlaneseq
  %v156 = vshrl.u32 %v155, 7
  %v157 = vsub.s32 1, %v156
  %v158 = vrot.slane %v149, %v157
  %v162 = vcombine.high %v20, %v20
  %v164 = vunpack.c.l.s4 1983009808
  %v165 = vunpack.c.0.s8 %v164
  %v166 = vlaneseq
  %v167 = vshrl.u32 %v166, 7
  %v168 = vsub.s32 %v165, %v167
  %v169 = vrot.slane %v20, %v168
  %v171 = vunpack.c.l.s4 1983009808
  %v172 = vunpack.c.0.s8 %v171
  %v173 = vlaneseq
  %v174 = vshrl.u32 %v173, 7
  %v175 = vsub.s32 %v172, %v174
  %v176 = vrot.slane %v162, %v175
  %v177 = vcombine.high %v169, %v169
  %v178 = vcombine.high %v176, %v176
  %183 = vmatprep.subr.mxu0 %v22
  %184 = vmatpush1.msra.mxu0 %v21
  %185 = vmatprep.subr.mxu0 %v24
  %186 = vmatpush1.msra.mxu0 %v23
  %187 = vmatprep.subr.mxu0 %v26
  %188 = vmatpush1.msra.mxu0 %v25
  %189 = vmatprep.subr.mxu0 %v28
  %190 = vmatpush1.msra.mxu0 %v27
  %191 = vmatprep.subr.mxu0 %v30
  %192 = vmatpush1.msra.mxu0 %v29
  %193 = vmatprep.subr.mxu0 %v32
  %194 = vmatpush1.msra.mxu0 %v31
  %195 = vmatprep.subr.mxu0 %v34
  %196 = vmatpush1.msra.mxu0 %v33
  %197 = vmatprep.subr.mxu0 %v36
  %198 = vmatpush1.msra.mxu0 %v35
  %199 = vmatprep.subr.mxu0 %v38
  %200 = vmatpush1.msra.mxu0 %v37
  %201 = vmatprep.subr.mxu0 %v40
  %202 = vmatpush1.msra.mxu0 %v39
  %203 = vmatprep.subr.mxu0 %v42
  %204 = vmatpush1.msra.mxu0 %v41
  %205 = vmatprep.subr.mxu0 %v44
  %206 = vmatpush1.msra.mxu0 %v43
  %207 = vmatprep.subr.mxu0 %v46
  %208 = vmatpush1.msra.mxu0 %v45
  %209 = vmatprep.subr.mxu0 %v48
  %210 = vmatpush1.msra.mxu0 %v47
  %211 = vmatprep.subr.mxu0 %v50
  %212 = vmatpush1.msra.mxu0 %v49
  %213 = vmatprep.subr.mxu0 %v52
  %214 = vmatpush1.msra.mxu0 %v51
  %215 = vmatprep.subr.mxu0 %v54
  %216 = vmatpush1.msra.mxu0 %v53
  %217 = vmatprep.subr.mxu0 %v56
  %218 = vmatpush1.msra.mxu0 %v55
  %219 = vmatprep.subr.mxu0 %v58
  %220 = vmatpush1.msra.mxu0 %v57
  %221 = vmatprep.subr.mxu0 %v60
  %222 = vmatpush1.msra.mxu0 %v59
  %223 = vmatprep.subr.mxu0 %v62
  %224 = vmatpush1.msra.mxu0 %v61
  %225 = vmatprep.subr.mxu0 %v64
  %226 = vmatpush1.msra.mxu0 %v63
  %227 = vmatprep.subr.mxu0 %v66
  %228 = vmatpush1.msra.mxu0 %v65
  %229 = vmatprep.subr.mxu0 %v68
  %230 = vmatpush1.msra.mxu0 %v67
  %231 = vmatprep.subr.mxu0 %v70
  %232 = vmatpush1.msra.mxu0 %v69
  %233 = vmatprep.subr.mxu0 %v72
  %234 = vmatpush1.msra.mxu0 %v71
  %235 = vmatprep.subr.mxu0 %v74
  %236 = vmatpush1.msra.mxu0 %v73
  %237 = vmatprep.subr.mxu0 %v76
  %238 = vmatpush1.msra.mxu0 %v75
  %239 = vmatprep.subr.mxu0 %v78
  %240 = vmatpush1.msra.mxu0 %v77
  %241 = vmatprep.subr.mxu0 %v80
  %242 = vmatpush1.msra.mxu0 %v79
  %243 = vmatprep.subr.mxu0 %v82
  %244 = vmatpush1.msra.mxu0 %v81
  %245 = vmatprep.subr.mxu0 %v84
  %246 = vmatpush1.msra.mxu0 %v83
  %247 = vmatprep.mubr.f32.mxu0 %v177
  %248 = vmatmul.mubr.f32.gmra.mrb[0].mxu0 %v169
  %v249 = vpop.f32.mrb[0].mxu0
  %v250 = vadd.f32 %v154, %v249
  %v251 = vpop.f32.mrb[0].mxu0
  %v252 = vadd.f32 %v158, %v251
  %253 = vdwg.mxu0
  %254 = vmatprep.subr.mxu0 %v86
  %255 = vmatpush1.msra.mxu0 %v85
  %256 = vmatprep.subr.mxu0 %v88
  %257 = vmatpush1.msra.mxu0 %v87
  %258 = vmatprep.subr.mxu0 %v90
  %259 = vmatpush1.msra.mxu0 %v89
  %260 = vmatprep.subr.mxu0 %v92
  %261 = vmatpush1.msra.mxu0 %v91
  %262 = vmatprep.subr.mxu0 %v94
  %263 = vmatpush1.msra.mxu0 %v93
  %264 = vmatprep.subr.mxu0 %v96
  %265 = vmatpush1.msra.mxu0 %v95
  %266 = vmatprep.subr.mxu0 %v98
  %267 = vmatpush1.msra.mxu0 %v97
  %268 = vmatprep.subr.mxu0 %v100
  %269 = vmatpush1.msra.mxu0 %v99
  %270 = vmatprep.subr.mxu0 %v102
  %271 = vmatpush1.msra.mxu0 %v101
  %272 = vmatprep.subr.mxu0 %v104
  %273 = vmatpush1.msra.mxu0 %v103
  %274 = vmatprep.subr.mxu0 %v106
  %275 = vmatpush1.msra.mxu0 %v105
  %276 = vmatprep.subr.mxu0 %v108
  %277 = vmatpush1.msra.mxu0 %v107
  %278 = vmatprep.subr.mxu0 %v110
  %279 = vmatpush1.msra.mxu0 %v109
  %280 = vmatprep.subr.mxu0 %v112
  %281 = vmatpush1.msra.mxu0 %v111
  %282 = vmatprep.subr.mxu0 %v114
  %283 = vmatpush1.msra.mxu0 %v113
  %284 = vmatprep.subr.mxu0 %v116
  %285 = vmatpush1.msra.mxu0 %v115
  %286 = vmatprep.subr.mxu0 %v118
  %287 = vmatpush1.msra.mxu0 %v117
  %288 = vmatprep.subr.mxu0 %v120
  %289 = vmatpush1.msra.mxu0 %v119
  %290 = vmatprep.subr.mxu0 %v122
  %291 = vmatpush1.msra.mxu0 %v121
  %292 = vmatprep.subr.mxu0 %v124
  %293 = vmatpush1.msra.mxu0 %v123
  %294 = vmatprep.subr.mxu0 %v126
  %295 = vmatpush1.msra.mxu0 %v125
  %296 = vmatprep.subr.mxu0 %v128
  %297 = vmatpush1.msra.mxu0 %v127
  %298 = vmatprep.subr.mxu0 %v130
  %299 = vmatpush1.msra.mxu0 %v129
  %300 = vmatprep.subr.mxu0 %v132
  %301 = vmatpush1.msra.mxu0 %v131
  %302 = vmatprep.subr.mxu0 %v134
  %303 = vmatpush1.msra.mxu0 %v133
  %304 = vmatprep.subr.mxu0 %v136
  %305 = vmatpush1.msra.mxu0 %v135
  %306 = vmatprep.subr.mxu0 %v138
  %307 = vmatpush1.msra.mxu0 %v137
  %308 = vmatprep.subr.mxu0 %v140
  %309 = vmatpush1.msra.mxu0 %v139
  %310 = vmatprep.subr.mxu0 %v142
  %311 = vmatpush1.msra.mxu0 %v141
  %312 = vmatprep.subr.mxu0 %v144
  %313 = vmatpush1.msra.mxu0 %v143
  %314 = vmatprep.subr.mxu0 %v146
  %315 = vmatpush1.msra.mxu0 %v145
  %316 = vmatprep.subr.mxu0 %v148
  %317 = vmatpush1.msra.mxu0 %v147
  %318 = vmatprep.mubr.f32.mxu0 %v178
  %319 = vmatmul.mubr.f32.gmra.mrb[0].mxu0 %v176
  %v320 = vpop.f32.mrb[0].mxu0
  %v321 = vadd.f32 %v250, %v320
  %v322 = vpop.f32.mrb[0].mxu0
  %v323 = vadd.f32 %v252, %v322
  %324 = vdwg.mxu0
  %v325 = vtanh.pop %v321
  %v326 = vtanh.pop %v323
  %v327 = vld [vmem:[%s3] sm:$0xff]
  %v328 = vld [vmem:[%s3 + $0x8] sm:$0xff]
  %v329 = vld [vmem:[%s3 + $0x10] sm:$0xff]
  %v330 = vld [vmem:[%s3 + $0x18] sm:$0xff]
  %v331 = vld [vmem:[%s3 + $0x20] sm:$0xff]
  %v332 = vld [vmem:[%s3 + $0x28] sm:$0xff]
  %v333 = vld [vmem:[%s3 + $0x30] sm:$0xff]
  %v334 = vld [vmem:[%s3 + $0x38] sm:$0xff]
  %v335 = vld [vmem:[%s3 + $0x40] sm:$0xff]
  %v336 = vld [vmem:[%s3 + $0x48] sm:$0xff]
  %v337 = vld [vmem:[%s3 + $0x50] sm:$0xff]
  %v338 = vld [vmem:[%s3 + $0x58] sm:$0xff]
  %v339 = vld [vmem:[%s3 + $0x60] sm:$0xff]
  %v340 = vld [vmem:[%s3 + $0x68] sm:$0xff]
  %v341 = vld [vmem:[%s3 + $0x70] sm:$0xff]
  %v342 = vld [vmem:[%s3 + $0x78] sm:$0xff]
  %v343 = vld [vmem:[%s3 + $0x80] sm:$0xff]
  %v344 = vld [vmem:[%s3 + $0x88] sm:$0xff]
  %v345 = vld [vmem:[%s3 + $0x90] sm:$0xff]
  %v346 = vld [vmem:[%s3 + $0x98] sm:$0xff]
  %v347 = vld [vmem:[%s3 + $0xa0] sm:$0xff]
  %v348 = vld [vmem:[%s3 + $0xa8] sm:$0xff]
  %v349 = vld [vmem:[%s3 + $0xb0] sm:$0xff]
  %v350 = vld [vmem:[%s3 + $0xb8] sm:$0xff]
  %v351 = vld [vmem:[%s3 + $0xc0] sm:$0xff]
  %v352 = vld [vmem:[%s3 + $0xc8] sm:$0xff]
  %v353 = vld [vmem:[%s3 + $0xd0] sm:$0xff]
  %v354 = vld [vmem:[%s3 + $0xd8] sm:$0xff]
  %v355 = vld [vmem:[%s3 + $0xe0] sm:$0xff]
  %v356 = vld [vmem:[%s3 + $0xe8] sm:$0xff]
  %v357 = vld [vmem:[%s3 + $0xf0] sm:$0xff]
  %v358 = vld [vmem:[%s3 + $0xf8] sm:$0xff]
  %v359 = vld [vmem:[%s4] sm:$0x1]
  %v361 = vlaneseq
  %v362 = vshrl.u32 %v361, 7
  %v363 = vsub.s32 0, %v362
  %v364 = vrot.slane %v359, %v363
  %366 = vmatprep.subr.mxu0 0.0
  %367 = vmatpush1.msra.mxu0 %v327
  %368 = vmatprep.subr.mxu0 0.0
  %369 = vmatpush1.msra.mxu0 %v328
  %370 = vmatprep.subr.mxu0 0.0
  %371 = vmatpush1.msra.mxu0 %v329
  %372 = vmatprep.subr.mxu0 0.0
  %373 = vmatpush1.msra.mxu0 %v330
  %374 = vmatprep.subr.mxu0 0.0
  %375 = vmatpush1.msra.mxu0 %v331
  %376 = vmatprep.subr.mxu0 0.0
  %377 = vmatpush1.msra.mxu0 %v332
  %378 = vmatprep.subr.mxu0 0.0
  %379 = vmatpush1.msra.mxu0 %v333
  %380 = vmatprep.subr.mxu0 0.0
  %381 = vmatpush1.msra.mxu0 %v334
  %382 = vmatprep.subr.mxu0 0.0
  %383 = vmatpush1.msra.mxu0 %v335
  %384 = vmatprep.subr.mxu0 0.0
  %385 = vmatpush1.msra.mxu0 %v336
  %386 = vmatprep.subr.mxu0 0.0
  %387 = vmatpush1.msra.mxu0 %v337
  %388 = vmatprep.subr.mxu0 0.0
  %389 = vmatpush1.msra.mxu0 %v338
  %390 = vmatprep.subr.mxu0 0.0
  %391 = vmatpush1.msra.mxu0 %v339
  %392 = vmatprep.subr.mxu0 0.0
  %393 = vmatpush1.msra.mxu0 %v340
  %394 = vmatprep.subr.mxu0 0.0
  %395 = vmatpush1.msra.mxu0 %v341
  %396 = vmatprep.subr.mxu0 0.0
  %397 = vmatpush1.msra.mxu0 %v342
  %398 = vmatprep.subr.mxu0 0.0
  %399 = vmatpush1.msra.mxu0 %v343
  %400 = vmatprep.subr.mxu0 0.0
  %401 = vmatpush1.msra.mxu0 %v344
  %402 = vmatprep.subr.mxu0 0.0
  %403 = vmatpush1.msra.mxu0 %v345
  %404 = vmatprep.subr.mxu0 0.0
  %405 = vmatpush1.msra.mxu0 %v346
  %406 = vmatprep.subr.mxu0 0.0
  %407 = vmatpush1.msra.mxu0 %v347
  %408 = vmatprep.subr.mxu0 0.0
  %409 = vmatpush1.msra.mxu0 %v348
  %410 = vmatprep.subr.mxu0 0.0
  %411 = vmatpush1.msra.mxu0 %v349
  %412 = vmatprep.subr.mxu0 0.0
  %413 = vmatpush1.msra.mxu0 %v350
  %414 = vmatprep.subr.mxu0 0.0
  %415 = vmatpush1.msra.mxu0 %v351
  %416 = vmatprep.subr.mxu0 0.0
  %417 = vmatpush1.msra.mxu0 %v352
  %418 = vmatprep.subr.mxu0 0.0
  %419 = vmatpush1.msra.mxu0 %v353
  %420 = vmatprep.subr.mxu0 0.0
  %421 = vmatpush1.msra.mxu0 %v354
  %422 = vmatprep.subr.mxu0 0.0
  %423 = vmatpush1.msra.mxu0 %v355
  %424 = vmatprep.subr.mxu0 0.0
  %425 = vmatpush1.msra.mxu0 %v356
  %426 = vmatprep.subr.mxu0 0.0
  %427 = vmatpush1.msra.mxu0 %v357
  %428 = vmatprep.subr.mxu0 0.0
  %429 = vmatpush1.msra.mxu0 %v358
  %430 = vmatprep.mubr.f32.mxu0 %v326
  %431 = vmatmul.mubr.f32.gmra.mrb[0].mxu0 %v325
  %v432 = vpop.f32.mrb[0].mxu0
  %v433 = vadd.f32 %v364, %v432
  %v434 = vpop.f32.mrb[0].mxu0
  %435 = vdwg.mxu0
  %v436 = vtanh.pop %v433
  %437 = vst [vmem:[%s5] sm:$0x3] %v436
  // Predicated region
  $region22: #{moa_mlp_forward.3} parent=0 // pred_check
    _
  $region23: #{moa_mlp_forward.3} parent=0 // pred_check_branch
    %439 = sbr.rel (0) target = $region25
  $region24: #{moa_mlp_forward.3} parent=0 // pred_region
    _
  $region25: #{moa_mlp_forward.3} parent=0 // pred_fallthru
    _
  // Predicated region
  $region26: #{moa_mlp_forward.3} parent=0 // pred_check
    _
  $region27: #{moa_mlp_forward.3} parent=0 // pred_check_branch
    %441 = sbr.rel (0) target = $region29
  $region28: #{moa_mlp_forward.3} parent=0 // pred_region
    _
  $region29: #{moa_mlp_forward.3} parent=0 // pred_fallthru
    _

</llo_original>
